<compile_context>
chip_gen: v5e
topology: v5e:2x2
jax: 0.10.0
libtpu: 0.0.40
codegen_flags: <defaults>
</compile_context>

<pallas_src>
import functools

import jax
import jax.numpy as jnp
from jax.experimental import pallas as pl
from jax.experimental.pallas import tpu as pltpu


# ------------------------------------------------------------------ kernel ---

def _crop_resize_kernel(params_ref, img_ref, out_ref, acc_ref, *,
                        C_TILE, H_in, W_in, H_out, W_out,
                        H_blk, wxt_cols, W_store, order, out_dtype):
    """One grid step == one (batch element, channel tile).

    params_ref : SMEM (B, 4) int32          -- [y0, y1, x0, x1] crop box
    img_ref    : VMEM (C_TILE, H_in, W_in)  bfloat16
    out_ref    : VMEM (C_TILE, H_out, W_store) out_dtype
    acc_ref    : VMEM bf16 scratch
                 rows-first: (C_TILE*H_blk, W_in)
                 cols-first: (H_in, C_TILE*wxt_cols)
    """
    b = pl.program_id(0)
    y0 = params_ref[b, 0].astype(jnp.float32)
    y1 = params_ref[b, 1].astype(jnp.float32)
    x0 = params_ref[b, 2].astype(jnp.float32)
    x1 = params_ref[b, 3].astype(jnp.float32)

    # ----- Wy (wy_rows, H_in): coordinate math on a narrow (rows, 1) column,
    #       full-shape work is only the two compares + selects.
    wy_rows = H_blk if order == "rows" else H_out
    oy = jax.lax.broadcasted_iota(jnp.int32, (wy_rows, 1), 0).astype(jnp.float32)
    step_y = (y1 - y0) * (1.0 / float(max(H_out - 1, 1)))     # guard H_out == 1
    cy = y0 + oy * step_y
    cy0 = jnp.floor(cy)
    fy = cy - cy0
    src_y = jax.lax.broadcasted_iota(jnp.int32, (wy_rows, H_in), 1).astype(jnp.float32)
    wy = (jnp.where(src_y == cy0, 1.0 - fy, 0.0)
          + jnp.where(src_y == cy0 + 1.0, fy, 0.0)).astype(jnp.bfloat16)

    # ----- Wx^T (W_in, wxt_cols): coordinate math on a narrow (1, cols) row.
    ox = jax.lax.broadcasted_iota(jnp.int32, (1, wxt_cols), 1)
    oxf = ox.astype(jnp.float32)
    step_x = (x1 - x0) * (1.0 / float(max(W_out - 1, 1)))     # guard W_out == 1
    cx = x0 + oxf * step_x
    cx0 = jnp.floor(cx)
    fx = cx - cx0
    src_x = jax.lax.broadcasted_iota(jnp.int32, (W_in, wxt_cols), 0).astype(jnp.float32)
    wxt = (jnp.where(src_x == cx0, 1.0 - fx, 0.0)
           + jnp.where(src_x == cx0 + 1.0, fx, 0.0))
    if wxt_cols > W_out:                       # zero the lane-pad columns
        wxt = jnp.where(ox < W_out, wxt, 0.0)
    wxt = wxt.astype(jnp.bfloat16)

    # ----- Separable resample.  The channel loop only feeds the bf16 scratch
    #       (live ranges bounded by the stores); the second stage is ONE big
    #       matmul so MXU push/drain overhead is amortized over all channels.
    if order == "rows":
        for c in range(C_TILE):
            rows = jnp.dot(wy, img_ref[c], preferred_element_type=jnp.float32)
            acc_ref[c * H_blk:(c + 1) * H_blk, :] = rows.astype(jnp.bfloat16)
        big = jnp.dot(acc_ref[...], wxt, preferred_element_type=jnp.float32)
        for c in range(C_TILE):
            out_ref[c] = big[c * H_blk:c * H_blk + H_out, :].astype(out_dtype)
    else:  # "cols"
        for c in range(C_TILE):
            cols = jnp.dot(img_ref[c], wxt, preferred_element_type=jnp.float32)
            acc_ref[:, c * wxt_cols:(c + 1) * wxt_cols] = cols.astype(jnp.bfloat16)
        big = jnp.dot(wy, acc_ref[...], preferred_element_type=jnp.float32)
        for c in range(C_TILE):
            out_ref[c] = big[:, c * wxt_cols:c * wxt_cols + W_store].astype(out_dtype)


def crop_and_resize_pallas(images, params_i32, out_hw, *,
                           out_dtype=None, pad_output=False,
                           order=None, channel_tile=None):
    """images: (B, C, H, W) (cast to bf16 for DMA); params_i32: (B, 4)
    [y0, y1, x0, x1] int32 crop boxes. Returns (B, C, H_out, W_out) (or a
    lane-dense 128-padded slab if pad_output=True)."""
    B, C, H_in, W_in = images.shape
    H_out, W_out = out_hw
    if out_dtype is None:
        out_dtype = images.dtype
    out_bytes = jnp.dtype(out_dtype).itemsize

    W_pad = ((W_out + 127) // 128) * 128       # lane-aligned width (scratch/pad)
    H_blk = ((H_out + 15) // 16) * 16          # bf16 sublane-aligned channel slot
    W_store = W_pad if pad_output else W_out   # output minor dim actually stored

    # --- contraction order: static FLOP-based choice (per-channel FLOPs). ---
    if order is None:
        flops_rows = H_blk * H_in * W_in + H_blk * W_in * W_store
        flops_cols = H_in * W_in * W_pad + H_out * H_in * W_pad
        order = "rows" if flops_rows <= flops_cols else "cols"
    wxt_cols = W_store if order == "rows" else W_pad

    # --- per-step VMEM footprint (double-buffered in/out blocks + scratch). ---
    def footprint(ct):
        in_blk = ct * H_in * W_in * 2                         # bf16 input block
        out_blk = ct * H_out * W_store * out_bytes
        scratch = (ct * H_blk * W_in if order == "rows"
                   else H_in * ct * wxt_cols) * 2             # bf16 scratch
        wts = (H_blk * H_in + W_in * wxt_cols) * 2            # bf16 Wy / Wx^T
        temps = (H_blk * H_in + W_in * wxt_cols) * 8          # f32 build temps
        return 2 * in_blk + 2 * out_blk + scratch + wts + temps

    # --- channel tile: largest divisor of C that keeps the step inside a
    #     conservative budget (fits v7x's 64 MiB/TC with headroom). ---
    if channel_tile is None:
        budget = 40 * 2 ** 20
        channel_tile = 1
        for ct in range(C, 0, -1):
            if C % ct == 0 and footprint(ct) <= budget:
                channel_tile = ct
                break
    assert C % channel_tile == 0, "channel_tile must divide C"
    n_ct = C // channel_tile
    # TODO(synk): if footprint(1) still exceeds the budget (single huge image),
    # the spatial dims would also need tiling; not implemented here.

    scratch_shape = ((channel_tile * H_blk, W_in) if order == "rows"
                     else (H_in, channel_tile * wxt_cols))
    vmem_limit = int(min(112 * 2 ** 20,
                         max(32 * 2 ** 20, footprint(channel_tile) + (4 << 20))))

    kernel = functools.partial(
        _crop_resize_kernel,
        C_TILE=channel_tile, H_in=H_in, W_in=W_in, H_out=H_out, W_out=W_out,
        H_blk=H_blk, wxt_cols=wxt_cols, W_store=W_store, order=order,
        out_dtype=out_dtype)

    return pl.pallas_call(
        kernel,
        out_shape=jax.ShapeDtypeStruct((B, C, H_out, W_store), out_dtype),
        grid_spec=pltpu.PrefetchScalarGridSpec(
            num_scalar_prefetch=1,                      # crop params -> SMEM
            grid=(B, n_ct),
            in_specs=[
                pl.BlockSpec((None, channel_tile, H_in, W_in),
                             lambda b, ct, p: (b, ct, 0, 0)),
            ],
            out_specs=pl.BlockSpec((None, channel_tile, H_out, W_store),
                                   lambda b, ct, p: (b, ct, 0, 0)),
            scratch_shapes=[pltpu.VMEM(scratch_shape, jnp.bfloat16)],
        ),
        compiler_params=pltpu.CompilerParams(
            dimension_semantics=("parallel", "parallel"),   # batch x channel-tile
            vmem_limit_bytes=vmem_limit),
    )(params_i32, images.astype(jnp.bfloat16))


# ------------------------------------------------------- parameter "glue" ----

def _uniform(key, shape, low, high, same_on_batch=False):
    # mirrors _adapted_uniform_k073; low/high may be scalars or (B,)
    if same_on_batch:
        u = jnp.broadcast_to(jax.random.uniform(key, (1,), dtype=jnp.float32), shape)
    else:
        u = jax.random.uniform(key, shape, dtype=jnp.float32)
    return u * (high - low) + low


def generate_crop_params(key, batch_size, img_hw, obj_bbox, scale, ratio, offset,
                         same_on_batch=False):
    """random_crop_size_generator_k073 + fixed_crop_generator -> (B,4) int32
    [y_start, y_start+crop_h, x_start, x_start+crop_w] (all integral)."""
    img_h, img_w = img_hw
    img_area = float(img_h * img_w)
    k1, k2, k3, k4 = jax.random.split(key, 4)

    # --- random_crop_size_generator_k073 ---
    target_area_scales = _uniform(k1, (batch_size,),
                                  jnp.float32(scale[0]), jnp.float32(scale[1]),
                                  same_on_batch)
    target_areas = target_area_scales * img_area
    log_r0 = jnp.log(jnp.float32(ratio[0]))
    log_r1 = jnp.log(jnp.float32(ratio[1]))
    aspect = jnp.exp(_uniform(k2, (batch_size,), log_r0, log_r1, same_on_batch))
    h_crop = jnp.clip(jnp.round(jnp.sqrt(target_areas / aspect)).astype(jnp.int32),
                      1, img_h)
    w_crop = jnp.clip(jnp.round(jnp.sqrt(target_areas * aspect)).astype(jnp.int32),
                      1, img_w)

    # --- fixed_crop_generator ---
    crop_h = h_crop.astype(jnp.float32)
    crop_w = w_crop.astype(jnp.float32)
    max_y_start = jnp.maximum(img_h - crop_h, 0.0)
    max_x_start = jnp.maximum(img_w - crop_w, 0.0)

    # obj_bbox is (B, 4) in (y1, x1, y2, x2) order (per reference indexing)
    obj_y_center = (obj_bbox[:, 0] + obj_bbox[:, 2]) / 2.0
    obj_x_center = (obj_bbox[:, 1] + obj_bbox[:, 3]) / 2.0

    y_a = obj_y_center - crop_h * (0.5 - offset[0])
    y_b = obj_y_center - crop_h * (0.5 - offset[1])
    x_a = obj_x_center - crop_w * (0.5 - offset[0])
    x_b = obj_x_center - crop_w * (0.5 - offset[1])

    y_lo = jnp.clip(jnp.minimum(y_a, y_b), 0.0, max_y_start)
    y_hi = jnp.maximum(jnp.clip(jnp.maximum(y_a, y_b), 0.0, max_y_start), y_lo)
    x_lo = jnp.clip(jnp.minimum(x_a, x_b), 0.0, max_x_start)
    x_hi = jnp.maximum(jnp.clip(jnp.maximum(x_a, x_b), 0.0, max_x_start), x_lo)

    y_start = jnp.floor(_uniform(k3, (batch_size,), y_lo, y_hi, same_on_batch))
    x_start = jnp.floor(_uniform(k4, (batch_size,), x_lo, x_hi, same_on_batch))

    # Box corners exactly as forward() builds them from bbox_generator_k073:
    # x_max = x_start + crop_w, y_max = y_start + crop_h (exclusive-style).
    # TODO(synk): the spec's `crop_and_resize` body is not provided; if it uses
    # inclusive corners (x_start + crop_w - 1), shift y1/x1 by -1 here.
    params = jnp.stack([y_start, y_start + crop_h,
                        x_start, x_start + crop_w], axis=1)
    return params.astype(jnp.int32)


# -------------------------------------------------------------- module-ish ---

class RandomResizedCropAroundTarget:
    """JAX port of the PyTorch module (bilinear, align_corners=True)."""

    def __init__(self, size, scale=(0.08, 1.0), ratio=(3.0 / 4.0, 4.0 / 3.0),
                 offset=(-0.25, 0.25), same_on_batch=False, out_dtype=None):
        # TODO(synk): only bilinear + align_corners=True is implemented
        # (matches the module defaults); nearest / align_corners=False are not.
        self.size = size
        self.scale = scale
        self.ratio = ratio
        self.offset = offset
        self.same_on_batch = same_on_batch
        self.out_dtype = out_dtype      # None -> match input dtype; bf16 allowed
        # No learnable parameters in this module.

    def __call__(self, key, in_tensor, obj_bbox):
        B, C, H, W = in_tensor.shape
        H_out, W_out = self.size
        params = generate_crop_params(key, B, (H, W), obj_bbox,
                                      self.scale, self.ratio, self.offset,
                                      self.same_on_batch)
        # Exact W_out minor dim stored by the kernel -> no padded-slab slice.
        return crop_and_resize_pallas(in_tensor, params, (H_out, W_out),
                                      out_dtype=self.out_dtype)


# --------------------------------------------------- pure-JAX reference ------

def _reference_crop_resize(x_f32, params_i32, size):
    """f32 reference of the same separable resample (for a sanity check)."""
    B, C, H, W = x_f32.shape
    H_out, W_out = size
    p = params_i32.astype(jnp.float32)

    def weights(start, stop, n_out, n_in):
        t = jnp.arange(n_out, dtype=jnp.float32)
        denom = float(max(n_out - 1, 1))
        coords = start[:, None] + t[None, :] * (stop - start)[:, None] / denom
        c0 = jnp.floor(coords)
        frac = coords - c0
        idx = jnp.arange(n_in, dtype=jnp.float32)[None, None, :]
        return ((idx == c0[:, :, None]) * (1.0 - frac)[:, :, None]
                + (idx == (c0 + 1.0)[:, :, None]) * frac[:, :, None])

    wy = weights(p[:, 0], p[:, 1], H_out, H)   # (B, H_out, H)
    wx = weights(p[:, 2], p[:, 3], W_out, W)   # (B, W_out, W)
    return jnp.einsum('boh,bchw,bxw->bcox', wy, x_f32, wx)


# ----------------------------------------------------------------------- main

if __name__ == "__main__":
    key = jax.random.PRNGKey(0)
    k_img, k_params = jax.random.split(key, 2)

    B, C, H, W = 2, 4, 16, 16
    x = jax.random.normal(k_img, (B, C, H, W), dtype=jnp.float32)
    # obj_bbox in (y1, x1, y2, x2) pixel coordinates, one box per batch element
    obj_bbox = jnp.array([[4.0, 4.0, 10.0, 12.0],
                          [2.0, 6.0, 8.0, 14.0]], dtype=jnp.float32)

    module = RandomResizedCropAroundTarget(size=(8, 8))
    out = module(k_params, x, obj_bbox)
    jax.block_until_ready(out)
    assert out.shape == (B, C, 8, 8), out.shape
    assert out.dtype == jnp.float32

    # Numerical sanity check vs. an f32 pure-JAX reference (bf16 kernel inputs
    # -> loose tolerance).
    params = generate_crop_params(k_params, B, (H, W), obj_bbox,
                                  module.scale, module.ratio, module.offset)
    ref = _reference_crop_resize(x, params, (8, 8))
    max_err = float(jnp.max(jnp.abs(out - ref)))
    assert max_err < 0.15, f"rows-first: max abs error vs reference: {max_err}"

    # Exercise the cols-first contraction order + multi-channel-tile grid path.
    out_cols = crop_and_resize_pallas(x, params, (8, 8), out_dtype=jnp.float32,
                                      order="cols", channel_tile=2)
    jax.block_until_ready(out_cols)
    err_cols = float(jnp.max(jnp.abs(out_cols - ref)))
    assert err_cols < 0.15, f"cols-first: max abs error vs reference: {err_cols}"

    # Exercise the lane-dense padded-slab output + bf16 output path.
    out_pad = crop_and_resize_pallas(x, params, (8, 8), out_dtype=jnp.bfloat16,
                                     pad_output=True)
    jax.block_until_ready(out_pad)
    assert out_pad.shape == (B, C, 8, 128), out_pad.shape
    err_pad = float(jnp.max(jnp.abs(out_pad[..., :8].astype(jnp.float32) - ref)))
    assert err_pad < 0.25, f"padded bf16: max abs error vs reference: {err_pad}"
    assert float(jnp.max(jnp.abs(out_pad[..., 8:].astype(jnp.float32)))) == 0.0

    print("KERNEL_OK")
</pallas_src>

<mosaic_0001>
module attributes {stable_mosaic.version = 11 : i64} {
  func.func @_crop_resize_kernel(%arg0: i32, %arg1: i32, %arg2: memref<2x4xi32, #tpu.memory_space<smem>>, %arg3: memref<1x4x16x16xbf16, #tpu.memory_space<vmem>>, %arg4: memref<1x4x8x8xf32, #tpu.memory_space<vmem>>, %arg5: memref<64x16xbf16, #tpu.memory_space<vmem>>) attributes {dimension_semantics = [#tpu.dimension_semantics<parallel>, #tpu.dimension_semantics<parallel>], iteration_bounds = array<i64: 2, 1>, scalar_prefetch = 1 : i64, scratch_operands = 1 : i64, tpu.core_type = #tpu.core_type<tc>, window_params = [{transform_indices = @transform_0, window_bounds = array<i64: 1, 4, 16, 16>}, {transform_indices = @transform_1, window_bounds = array<i64: 1, 4, 8, 8>}]} {
    %0 = arith.index_cast %arg0 : i32 to index
    %c0 = arith.constant 0 : index
    %1 = memref.load %arg2[%0, %c0] : memref<2x4xi32, #tpu.memory_space<smem>>
    %2 = arith.sitofp %1 : i32 to f32
    %3 = arith.index_cast %arg0 : i32 to index
    %c1 = arith.constant 1 : index
    %4 = memref.load %arg2[%3, %c1] : memref<2x4xi32, #tpu.memory_space<smem>>
    %5 = arith.sitofp %4 : i32 to f32
    %6 = arith.index_cast %arg0 : i32 to index
    %c2 = arith.constant 2 : index
    %7 = memref.load %arg2[%6, %c2] : memref<2x4xi32, #tpu.memory_space<smem>>
    %8 = arith.sitofp %7 : i32 to f32
    %9 = arith.index_cast %arg0 : i32 to index
    %c3 = arith.constant 3 : index
    %10 = memref.load %arg2[%9, %c3] : memref<2x4xi32, #tpu.memory_space<smem>>
    %11 = arith.sitofp %10 : i32 to f32
    %12 = tpu.iota {dimensions = array<i32: 0>} : vector<16x1xi32>
    %13 = arith.sitofp %12 : vector<16x1xi32> to vector<16x1xf32>
    %14 = arith.subf %5, %2 : f32
    %cst = arith.constant 0.142857149 : f32
    %15 = arith.mulf %14, %cst : f32
    %16 = vector.broadcast %15 : f32 to vector<16x1xf32>
    %17 = arith.mulf %13, %16 : vector<16x1xf32>
    %18 = vector.broadcast %2 : f32 to vector<16x1xf32>
    %19 = arith.addf %18, %17 : vector<16x1xf32>
    %20 = math.floor %19 : vector<16x1xf32>
    %21 = arith.subf %19, %20 : vector<16x1xf32>
    %22 = tpu.iota {dimensions = array<i32: 1>} : vector<16x16xi32>
    %23 = arith.sitofp %22 : vector<16x16xi32> to vector<16x16xf32>
    %24 = vector.broadcast %20 : vector<16x1xf32> to vector<16x16xf32>
    %25 = arith.cmpf oeq, %23, %24 : vector<16x16xf32>
    %cst_0 = arith.constant 1.000000e+00 : f32
    %26 = vector.broadcast %cst_0 : f32 to vector<16x1xf32>
    %27 = arith.subf %26, %21 : vector<16x1xf32>
    %cst_1 = arith.constant 0.000000e+00 : f32
    %28 = vector.shape_cast %27 : vector<16x1xf32> to vector<16x1xf32>
    %29 = vector.broadcast %28 : vector<16x1xf32> to vector<16x16xf32>
    %30 = vector.broadcast %cst_1 : f32 to vector<16x16xf32>
    %31 = arith.select %25, %29, %30 : vector<16x16xi1>, vector<16x16xf32>
    %cst_2 = arith.constant 1.000000e+00 : f32
    %32 = vector.broadcast %cst_2 : f32 to vector<16x1xf32>
    %33 = arith.addf %20, %32 : vector<16x1xf32>
    %34 = vector.broadcast %33 : vector<16x1xf32> to vector<16x16xf32>
    %35 = arith.cmpf oeq, %23, %34 : vector<16x16xf32>
    %cst_3 = arith.constant 0.000000e+00 : f32
    %36 = vector.shape_cast %21 : vector<16x1xf32> to vector<16x1xf32>
    %37 = vector.broadcast %36 : vector<16x1xf32> to vector<16x16xf32>
    %38 = vector.broadcast %cst_3 : f32 to vector<16x16xf32>
    %39 = arith.select %35, %37, %38 : vector<16x16xi1>, vector<16x16xf32>
    %40 = arith.addf %31, %39 : vector<16x16xf32>
    %41 = arith.truncf %40 : vector<16x16xf32> to vector<16x16xbf16>
    %42 = tpu.iota {dimensions = array<i32: 1>} : vector<1x8xi32>
    %43 = arith.sitofp %42 : vector<1x8xi32> to vector<1x8xf32>
    %44 = arith.subf %11, %8 : f32
    %cst_4 = arith.constant 0.142857149 : f32
    %45 = arith.mulf %44, %cst_4 : f32
    %46 = vector.broadcast %45 : f32 to vector<1x8xf32>
    %47 = arith.mulf %43, %46 : vector<1x8xf32>
    %48 = vector.broadcast %8 : f32 to vector<1x8xf32>
    %49 = arith.addf %48, %47 : vector<1x8xf32>
    %50 = math.floor %49 : vector<1x8xf32>
    %51 = arith.subf %49, %50 : vector<1x8xf32>
    %52 = tpu.iota {dimensions = array<i32: 0>} : vector<16x8xi32>
    %53 = arith.sitofp %52 : vector<16x8xi32> to vector<16x8xf32>
    %54 = vector.broadcast %50 : vector<1x8xf32> to vector<16x8xf32>
    %55 = arith.cmpf oeq, %53, %54 : vector<16x8xf32>
    %cst_5 = arith.constant 1.000000e+00 : f32
    %56 = vector.broadcast %cst_5 : f32 to vector<1x8xf32>
    %57 = arith.subf %56, %51 : vector<1x8xf32>
    %cst_6 = arith.constant 0.000000e+00 : f32
    %58 = vector.shape_cast %57 : vector<1x8xf32> to vector<1x8xf32>
    %59 = vector.broadcast %58 : vector<1x8xf32> to vector<16x8xf32>
    %60 = vector.broadcast %cst_6 : f32 to vector<16x8xf32>
    %61 = arith.select %55, %59, %60 : vector<16x8xi1>, vector<16x8xf32>
    %cst_7 = arith.constant 1.000000e+00 : f32
    %62 = vector.broadcast %cst_7 : f32 to vector<1x8xf32>
    %63 = arith.addf %50, %62 : vector<1x8xf32>
    %64 = vector.broadcast %63 : vector<1x8xf32> to vector<16x8xf32>
    %65 = arith.cmpf oeq, %53, %64 : vector<16x8xf32>
    %cst_8 = arith.constant 0.000000e+00 : f32
    %66 = vector.shape_cast %51 : vector<1x8xf32> to vector<1x8xf32>
    %67 = vector.broadcast %66 : vector<1x8xf32> to vector<16x8xf32>
    %68 = vector.broadcast %cst_8 : f32 to vector<16x8xf32>
    %69 = arith.select %65, %67, %68 : vector<16x8xi1>, vector<16x8xf32>
    %70 = arith.addf %61, %69 : vector<16x8xf32>
    %71 = arith.truncf %70 : vector<16x8xf32> to vector<16x8xbf16>
    %c0_9 = arith.constant 0 : index
    %c0_10 = arith.constant 0 : index
    %c0_11 = arith.constant 0 : index
    %c0_12 = arith.constant 0 : index
    %72 = vector.load %arg3[%c0_9, %c0_10, %c0_11, %c0_12] : memref<1x4x16x16xbf16, #tpu.memory_space<vmem>>, vector<1x1x16x16xbf16>
    %73 = vector.shape_cast %72 : vector<1x1x16x16xbf16> to vector<16x16xbf16>
    %cst_13 = arith.constant dense<0.000000e+00> : vector<16x16xf32>
    %74 = tpu.matmul %41, %73, %cst_13 {dimension_numbers = #tpu.dot_dimension_numbers<[1], [0], [0], [1], [0, 0, 1, 1], [], []>} : vector<16x16xbf16>, vector<16x16xbf16>, vector<16x16xf32> -> vector<16x16xf32>
    %75 = arith.truncf %74 : vector<16x16xf32> to vector<16x16xbf16>
    %c0_14 = arith.constant 0 : index
    %c0_15 = arith.constant 0 : index
    %76 = vector.load %arg5[%c0_14, %c0_15] : memref<64x16xbf16, #tpu.memory_space<vmem>>, vector<16x16xbf16>
    tpu.vector_store %arg5[%c0_14, %c0_15], %75 {strides = array<i32>} : memref<64x16xbf16, #tpu.memory_space<vmem>>, vector<16x16xbf16>,
    %c0_16 = arith.constant 0 : index
    %c1_17 = arith.constant 1 : index
    %c0_18 = arith.constant 0 : index
    %c0_19 = arith.constant 0 : index
    %77 = vector.load %arg3[%c0_16, %c1_17, %c0_18, %c0_19] : memref<1x4x16x16xbf16, #tpu.memory_space<vmem>>, vector<1x1x16x16xbf16>
    %78 = vector.shape_cast %77 : vector<1x1x16x16xbf16> to vector<16x16xbf16>
    %cst_20 = arith.constant dense<0.000000e+00> : vector<16x16xf32>
    %79 = tpu.matmul %41, %78, %cst_20 {dimension_numbers = #tpu.dot_dimension_numbers<[1], [0], [0], [1], [0, 0, 1, 1], [], []>} : vector<16x16xbf16>, vector<16x16xbf16>, vector<16x16xf32> -> vector<16x16xf32>
    %80 = arith.truncf %79 : vector<16x16xf32> to vector<16x16xbf16>
    %c16 = arith.constant 16 : index
    %c0_21 = arith.constant 0 : index
    %81 = vector.load %arg5[%c16, %c0_21] : memref<64x16xbf16, #tpu.memory_space<vmem>>, vector<16x16xbf16>
    tpu.vector_store %arg5[%c16, %c0_21], %80 {strides = array<i32>} : memref<64x16xbf16, #tpu.memory_space<vmem>>, vector<16x16xbf16>,
    %c0_22 = arith.constant 0 : index
    %c2_23 = arith.constant 2 : index
    %c0_24 = arith.constant 0 : index
    %c0_25 = arith.constant 0 : index
    %82 = vector.load %arg3[%c0_22, %c2_23, %c0_24, %c0_25] : memref<1x4x16x16xbf16, #tpu.memory_space<vmem>>, vector<1x1x16x16xbf16>
    %83 = vector.shape_cast %82 : vector<1x1x16x16xbf16> to vector<16x16xbf16>
    %cst_26 = arith.constant dense<0.000000e+00> : vector<16x16xf32>
    %84 = tpu.matmul %41, %83, %cst_26 {dimension_numbers = #tpu.dot_dimension_numbers<[1], [0], [0], [1], [0, 0, 1, 1], [], []>} : vector<16x16xbf16>, vector<16x16xbf16>, vector<16x16xf32> -> vector<16x16xf32>
    %85 = arith.truncf %84 : vector<16x16xf32> to vector<16x16xbf16>
    %c32 = arith.constant 32 : index
    %c0_27 = arith.constant 0 : index
    %86 = vector.load %arg5[%c32, %c0_27] : memref<64x16xbf16, #tpu.memory_space<vmem>>, vector<16x16xbf16>
    tpu.vector_store %arg5[%c32, %c0_27], %85 {strides = array<i32>} : memref<64x16xbf16, #tpu.memory_space<vmem>>, vector<16x16xbf16>,
    %c0_28 = arith.constant 0 : index
    %c3_29 = arith.constant 3 : index
    %c0_30 = arith.constant 0 : index
    %c0_31 = arith.constant 0 : index
    %87 = vector.load %arg3[%c0_28, %c3_29, %c0_30, %c0_31] : memref<1x4x16x16xbf16, #tpu.memory_space<vmem>>, vector<1x1x16x16xbf16>
    %88 = vector.shape_cast %87 : vector<1x1x16x16xbf16> to vector<16x16xbf16>
    %cst_32 = arith.constant dense<0.000000e+00> : vector<16x16xf32>
    %89 = tpu.matmul %41, %88, %cst_32 {dimension_numbers = #tpu.dot_dimension_numbers<[1], [0], [0], [1], [0, 0, 1, 1], [], []>} : vector<16x16xbf16>, vector<16x16xbf16>, vector<16x16xf32> -> vector<16x16xf32>
    %90 = arith.truncf %89 : vector<16x16xf32> to vector<16x16xbf16>
    %c48 = arith.constant 48 : index
    %c0_33 = arith.constant 0 : index
    %91 = vector.load %arg5[%c48, %c0_33] : memref<64x16xbf16, #tpu.memory_space<vmem>>, vector<16x16xbf16>
    tpu.vector_store %arg5[%c48, %c0_33], %90 {strides = array<i32>} : memref<64x16xbf16, #tpu.memory_space<vmem>>, vector<16x16xbf16>,
    %c0_34 = arith.constant 0 : index
    %c0_35 = arith.constant 0 : index
    %92 = vector.load %arg5[%c0_34, %c0_35] : memref<64x16xbf16, #tpu.memory_space<vmem>>, vector<64x16xbf16>
    %cst_36 = arith.constant dense<0.000000e+00> : vector<64x8xf32>
    %93 = tpu.matmul %92, %71, %cst_36 {dimension_numbers = #tpu.dot_dimension_numbers<[1], [0], [0], [1], [0, 0, 1, 1], [], []>} : vector<64x16xbf16>, vector<16x8xbf16>, vector<64x8xf32> -> vector<64x8xf32>
    %94 = vector.extract_strided_slice %93 {offsets = [0, 0], sizes = [8, 8], strides = [1, 1]} : vector<64x8xf32> to vector<8x8xf32>
    %c0_37 = arith.constant 0 : index
    %c0_38 = arith.constant 0 : index
    %c0_39 = arith.constant 0 : index
    %c0_40 = arith.constant 0 : index
    %95 = vector.load %arg4[%c0_37, %c0_38, %c0_39, %c0_40] : memref<1x4x8x8xf32, #tpu.memory_space<vmem>>, vector<1x1x8x8xf32>
    %96 = vector.shape_cast %95 : vector<1x1x8x8xf32> to vector<8x8xf32>
    %97 = vector.shape_cast %94 : vector<8x8xf32> to vector<1x1x8x8xf32>
    tpu.vector_store %arg4[%c0_37, %c0_38, %c0_39, %c0_40], %97 {strides = array<i32>} : memref<1x4x8x8xf32, #tpu.memory_space<vmem>>, vector<1x1x8x8xf32>,
    %98 = vector.extract_strided_slice %93 {offsets = [16, 0], sizes = [8, 8], strides = [1, 1]} : vector<64x8xf32> to vector<8x8xf32>
    %c0_41 = arith.constant 0 : index
    %c1_42 = arith.constant 1 : index
    %c0_43 = arith.constant 0 : index
    %c0_44 = arith.constant 0 : index
    %99 = vector.load %arg4[%c0_41, %c1_42, %c0_43, %c0_44] : memref<1x4x8x8xf32, #tpu.memory_space<vmem>>, vector<1x1x8x8xf32>
    %100 = vector.shape_cast %99 : vector<1x1x8x8xf32> to vector<8x8xf32>
    %101 = vector.shape_cast %98 : vector<8x8xf32> to vector<1x1x8x8xf32>
    tpu.vector_store %arg4[%c0_41, %c1_42, %c0_43, %c0_44], %101 {strides = array<i32>} : memref<1x4x8x8xf32, #tpu.memory_space<vmem>>, vector<1x1x8x8xf32>,
    %102 = vector.extract_strided_slice %93 {offsets = [32, 0], sizes = [8, 8], strides = [1, 1]} : vector<64x8xf32> to vector<8x8xf32>
    %c0_45 = arith.constant 0 : index
    %c2_46 = arith.constant 2 : index
    %c0_47 = arith.constant 0 : index
    %c0_48 = arith.constant 0 : index
    %103 = vector.load %arg4[%c0_45, %c2_46, %c0_47, %c0_48] : memref<1x4x8x8xf32, #tpu.memory_space<vmem>>, vector<1x1x8x8xf32>
    %104 = vector.shape_cast %103 : vector<1x1x8x8xf32> to vector<8x8xf32>
    %105 = vector.shape_cast %102 : vector<8x8xf32> to vector<1x1x8x8xf32>
    tpu.vector_store %arg4[%c0_45, %c2_46, %c0_47, %c0_48], %105 {strides = array<i32>} : memref<1x4x8x8xf32, #tpu.memory_space<vmem>>, vector<1x1x8x8xf32>,
    %106 = vector.extract_strided_slice %93 {offsets = [48, 0], sizes = [8, 8], strides = [1, 1]} : vector<64x8xf32> to vector<8x8xf32>
    %c0_49 = arith.constant 0 : index
    %c3_50 = arith.constant 3 : index
    %c0_51 = arith.constant 0 : index
    %c0_52 = arith.constant 0 : index
    %107 = vector.load %arg4[%c0_49, %c3_50, %c0_51, %c0_52] : memref<1x4x8x8xf32, #tpu.memory_space<vmem>>, vector<1x1x8x8xf32>
    %108 = vector.shape_cast %107 : vector<1x1x8x8xf32> to vector<8x8xf32>
    %109 = vector.shape_cast %106 : vector<8x8xf32> to vector<1x1x8x8xf32>
    tpu.vector_store %arg4[%c0_49, %c3_50, %c0_51, %c0_52], %109 {strides = array<i32>} : memref<1x4x8x8xf32, #tpu.memory_space<vmem>>, vector<1x1x8x8xf32>,
    return
  }
  func.func @transform_0(%arg0: i32, %arg1: i32, %arg2: memref<2x4xi32, #tpu.memory_space<smem>>) -> (i32, i32, i32, i32) {
    %c0_i32 = arith.constant 0 : i32
    %c0_i32_0 = arith.constant 0 : i32
    %c0_i32_1 = arith.constant 0 : i32
    return %arg0, %arg1, %c0_i32, %c0_i32_0 : i32, i32, i32, i32
  }
  func.func @transform_1(%arg0: i32, %arg1: i32, %arg2: memref<2x4xi32, #tpu.memory_space<smem>>) -> (i32, i32, i32, i32) {
    %c0_i32 = arith.constant 0 : i32
    %c0_i32_0 = arith.constant 0 : i32
    %c0_i32_1 = arith.constant 0 : i32
    return %arg0, %arg1, %c0_i32, %c0_i32_0 : i32, i32, i32, i32
  }
}

</mosaic_0001>

<llo_original>
// kernel: tpu_custom_call.1
$region0: #{tpu_custom_call.1}
  #allocation0 [shape = 'u32[]', space=smem, size = 0x4, offset = 0x4, fixed_abs, tag = 'smem constant byte address 0x4 - core index']
  #allocation1 [shape = 'u32[72,128]{1,0:T(1,128)}', space=vmem, size = 0x9000, scoped, tag = 'internal scratch']
  #allocation2 [shape = 'bf16[64,16]{1,0:T(8,128)(2,1)}', space=vmem, size = 0x4000, scoped, tag = 'scratch operand']
  #allocation3 [shape = 's32[1]{0}', space=sflag, size = 0x4, scoped, tag = 'scoped memory for tpu_custom_call.1']
  #allocation4 [shape = 'u8[1024]{0}', space=smem, size = 0x400, scoped, tag = 'prefetched SMEM operand 0']
  %s0 = inlined_call_operand.hbm [shape: s32[2,4], index: 0, kind: input, shape index: {}]
  %s1 = inlined_call_operand.hbm [shape: bf16[2,4,16,16], index: 1, kind: input, shape index: {}]
  %s2 = inlined_call_operand.hbm [shape: f32[2,4,8,8], index: 2, kind: output, shape index: {}]
  %s3 = sld [smem:[#allocation0]]
  $region41: #{tpu_custom_call.1} parent=0
    _
  %s5 = ssub.s32 1, %s3
  %s6 = scalar_select 0, %s5, %s3
  %s8 = sshll.u32 %s0, 4
  %s9 = int_to_ptr.hbm [resolvable:$true] %s8
  %11 = dma.hbm_to_smem %s9, 32, [#allocation4], [#allocation3]
  %13 = dma.done [#allocation3], 32
  %14 = sfence
  $region1: #{tpu_custom_call.1} parent=0
    #allocation5 [shape = 'u8[32768]{0}', space=vmem, size = 0x8000, scoped, tag = 'input window, operand 1']
    #allocation6 [shape = 's32[2]{0}', space=sflag, size = 0x8, scoped, tag = 'scoped memory for tpu_custom_call.1']
    #allocation7 [shape = 's32[2]{0}', space=sflag, size = 0x8, scoped, tag = 'scoped memory for tpu_custom_call.1']
    #allocation8 [shape = 'u8[32768]{0}', space=vmem, size = 0x8000, scoped, tag = 'output window, operand 0']
    %15 = vsyncpa [#allocation6], 0
    %s16 = scalar_lea.sflag [#allocation6], 1
    %17 = vsyncpa %s16, 0
    %18 = vsyncpa [#allocation7], 0
    %s19 = scalar_lea.sflag [#allocation7], 1
    %20 = vsyncpa %s19, 0
    loop: start=0, step=1, limit=4
    $region2: #{tpu_custom_call.1} parent=1 // loop_pre_header
      _
    $region3: #{tpu_custom_call.1} parent=1 // loop_header
      %s22 = sphi 0, %s26
      %p23 = scmp.ge.s32.totalorder %s22, 4
      %s29 = sphi 0, %s41
      %s30 = sphi 0, %s37
      %s31 = sphi 0, %s29
      %s32 = sphi 0, %s30
      %s33 = sphi 0, %s31
      %s34 = sphi 0, %s32
      %s46 = sphi 0, %s48
      %s49 = sphi 0, %s46
      %s50 = sphi 0, %s49
      %s66 = sphi 0, %s50
      %s74 = sphi 0, %s76
      %s77 = sphi 0, %s74
      %s78 = sphi 0, %s77
      %s94 = sphi 0, %s78
    $region4: #{tpu_custom_call.1} parent=1 // loop_header_branch
      %25 = sbr.rel (%p23) target = $region8
    $region5: #{tpu_custom_call.1} parent=1 // loop_body
      %s27 = ssub.s32 %s22, 1
      %s28 = ssub.s32 %s22, 2
      %s35 = sadd.s32 1, %s30
      %p36 = scmp.ge.s32.totalorder %s35, 1
      %s37 = scalar_select %p36, 0, %s35
      %s38 = sadd.s32 1, %s29
      %s39 = scalar_select %p36, %s38, %s29
      %p40 = scmp.ge.s32.totalorder %s39, 2
      %s41 = scalar_select %p40, 0, %s39
      %s42 = ssub.s32 %s29, %s41
      %s43 = ssub.s32 %s30, %s37
      %s44 = sor.u32 %s42, %s43
      %p45 = scmp.eq.s32.totalorder %s44, 0
      %s47 = sadd.s32 %s46, 1
      %s48 = scalar_select %p45, %s46, %s47
      %p51 = pneg %p45
      %p52 = scmp.eq.s32.totalorder %s22, 1
      %p53 = por %p51, %p52
      %p54 = scmp.ne.s32.totalorder %s46, %s49
      %p55 = scmp.eq.s32.totalorder %s22, 0
      %p56 = por %p54, %p55
      %p57 = scmp.ne.s32.totalorder %s46, %s49
      %p58 = scmp.eq.s32.totalorder %s27, 1
      %p59 = por %p57, %p58
      %p60 = scmp.ne.s32.totalorder %s49, %s50
      %p61 = scmp.eq.s32.totalorder %s27, 0
      %p62 = por %p60, %p61
      %p63 = scmp.ne.s32.totalorder %s49, %s50
      %p64 = scmp.eq.s32.totalorder %s28, 1
      %p65 = por %p63, %p64
      %p67 = scmp.ne.s32.totalorder %s50, %s66
      %p68 = scmp.eq.s32.totalorder %s28, 0
      %p69 = por %p67, %p68
      %s70 = ssub.s32 %s29, %s41
      %s71 = ssub.s32 %s30, %s37
      %s72 = sor.u32 %s70, %s71
      %p73 = scmp.eq.s32.totalorder %s72, 0
      %s75 = sadd.s32 %s74, 1
      %s76 = scalar_select %p73, %s74, %s75
      %p79 = pneg %p73
      %p80 = scmp.eq.s32.totalorder %s22, 1
      %p81 = por %p79, %p80
      %p82 = scmp.ne.s32.totalorder %s74, %s77
      %p83 = scmp.eq.s32.totalorder %s22, 0
      %p84 = por %p82, %p83
      %p85 = scmp.ne.s32.totalorder %s74, %s77
      %p86 = scmp.eq.s32.totalorder %s27, 1
      %p87 = por %p85, %p86
      %p88 = scmp.ne.s32.totalorder %s77, %s78
      %p89 = scmp.eq.s32.totalorder %s27, 0
      %p90 = por %p88, %p89
      %p91 = scmp.ne.s32.totalorder %s77, %s78
      %p92 = scmp.eq.s32.totalorder %s28, 1
      %p93 = por %p91, %p92
      %p95 = scmp.ne.s32.totalorder %s78, %s94
      %p96 = scmp.eq.s32.totalorder %s28, 0
      %p97 = por %p95, %p96
      %p98 = scmp.le.s32.totalorder 1, %s22
      %p99 = scmp.lt.s32.totalorder %s22, 3
      %p100 = pnand %p98, %p99
      %p101 = pneg %p100
      // Predicated region
      $region9: #{tpu_custom_call.1} parent=5 // pred_check
        _
      $region10: #{tpu_custom_call.1} parent=5 // pred_check_branch
        %103 = sbr.rel (%p100) target = $region12
      $region11: #{tpu_custom_call.1} parent=5 // pred_region
        %s104 = ssub.s32 %s22, 1
      $region12: #{tpu_custom_call.1} parent=5 // pred_fallthru
        _
      %p105 = scmp.lt.s32.totalorder %s22, 2
      // Predicated region
      $region13: #{tpu_custom_call.1} parent=5 // pred_check
        %p106 = pneg %p105
      $region14: #{tpu_custom_call.1} parent=5 // pred_check_branch
        %108 = sbr.rel (%p106) target = $region16
      $region15: #{tpu_custom_call.1} parent=5 // pred_region
        // Predicated region
        $region17: #{tpu_custom_call.1} parent=15 // pred_check
          %p109 = pneg %p56
        $region18: #{tpu_custom_call.1} parent=15 // pred_check_branch
          %111 = sbr.rel (%p109) target = $region20
        $region19: #{tpu_custom_call.1} parent=15 // pred_region
          %s112 = sand.u32 %s46, 1
          %s113 = scalar_lea.sflag [#allocation6], %s112
          %s114 = sand.u32 %s46, 1
          %s115 = smul.addr %s114, 32
          %s116 = scalar_lea.vmem [#allocation5], %s115
          %s117 = smul.u32 4, %s30
          %119 = vsyncadd %s113, 0
          %s120 = smul.addr %s117, 2
          %s121 = smul.addr %s29, 8
          %s122 = sadd.s32 %s120, %s121
          %s123 = smul.addr %s122, 4
          %s124 = scalar_lea.hbm %s1, %s123
          %s125 = sshll.u32 %s124, 4
          %s126 = int_to_ptr.hbm [resolvable:$true] %s125
          %s127 = sshll.u32 %s116, 4
          %s128 = int_to_ptr.vmem [resolvable:$true] %s127
          %133 = dma.hbm_to_vmem [thread:$0]  %s126, 512, %s128, %s113, 64, 64, 4
        $region20: #{tpu_custom_call.1} parent=15 // pred_fallthru
          _
      $region16: #{tpu_custom_call.1} parent=5 // pred_fallthru
        _
      %p134 = scmp.le.s32.totalorder 1, %s22
      %p135 = scmp.lt.s32.totalorder %s22, 3
      %p136 = pnand %p134, %p135
      %p137 = pneg %p136
      // Predicated region
      $region21: #{tpu_custom_call.1} parent=5 // pred_check
        _
      $region22: #{tpu_custom_call.1} parent=5 // pred_check_branch
        %139 = sbr.rel (%p136) target = $region24
      $region23: #{tpu_custom_call.1} parent=5 // pred_region
        %s140 = ssub.s32 %s22, 1
        %s141 = sand.u32 %s49, 1
        %s142 = scalar_lea.sflag [#allocation6], %s141
        %s143 = sand.u32 %s49, 1
        %s144 = smul.addr %s143, 32
        %s145 = scalar_lea.vmem [#allocation5], %s144
        // Predicated region
        $region25: #{tpu_custom_call.1} parent=23 // pred_check
          %p146 = pneg %p62
        $region26: #{tpu_custom_call.1} parent=23 // pred_check_branch
          %148 = sbr.rel (%p146) target = $region28
        $region27: #{tpu_custom_call.1} parent=23 // pred_region
          %150 = dma.done %s142, 512
        $region28: #{tpu_custom_call.1} parent=23 // pred_fallthru
          _
        %s151 = sand.u32 %s49, 1
        %s152 = scalar_lea.sflag [#allocation6], %s151
        %s153 = sand.u32 %s49, 1
        %s154 = smul.addr %s153, 32
        %s155 = scalar_lea.vmem [#allocation5], %s154
        %p156 = pneg %p62
        %p157 = pneg %p59
        %p158 = pneg %p90
        %p159 = pneg %p87
        %s160 = sand.u32 %s77, 1
        %s161 = scalar_lea.sflag [#allocation7], %s160
        %s162 = sand.u32 %s77, 1
        %s163 = smul.addr %s162, 32
        %s164 = scalar_lea.vmem [#allocation8], %s163
        %s165 = smul.u32 4, %s32
        %s166 = smul.u32 4, %s32
        %s168 = smul.u32 %s31, 128
        %s169 = sld [smem:[#allocation4 + %s168]]
        %s170 = scvt.s32.f32 %s169
        %s171 = sadd.s32 %s168, 1
        %s172 = sld [smem:[#allocation4 + %s171]]
        %s173 = scvt.s32.f32 %s172
        %s174 = sadd.s32 %s168, 2
        %s175 = sld [smem:[#allocation4 + %s174]]
        %s176 = scvt.s32.f32 %s175
        %s177 = sadd.s32 %s168, 3
        %s178 = sld [smem:[#allocation4 + %s177]]
        %s179 = scvt.s32.f32 %s178
        %v180 = vlaneseq
        %v181 = vshrl.u32 %v180, 7
        %v182 = vadd.s32 %v181, 8
        %v183 = vcvt.s32.f32 %v181
        %v184 = vcvt.s32.f32 %v182
        %s185 = ssub.f32 %s173, %s170
        %s186 = smul.f32 %s185, 0.14285715
        %v187 = vstv %s186
        %v188 = vmul.f32 %v183, %v187
        %v189 = vmul.f32 %v184, %v187
        %v190 = vstv %s170
        %v191 = vadd.f32 %v190, %v188
        %v192 = vadd.f32 %v190, %v189
        %v193 = vfloor.f32 %v191
        %v194 = vfloor.f32 %v192
        %v195 = vsub.f32 %v191, %v193
        %v196 = vsub.f32 %v192, %v194
        %v197 = vlaneseq
        %v198 = vand.u32 %v197, 127
        %v199 = vcvt.s32.f32 %v198
        %vm200 = vcmp.eq.f32.partialorder %v199, %v193
        %vm201 = vcmp.eq.f32.partialorder %v199, %v194
        %v202 = vsub.f32 1.0, %v195
        %v203 = vsub.f32 1.0, %v196
        %v204 = vsel %vm200, %v202, 0.0
        %v205 = vsel %vm201, %v203, 0.0
        %v206 = vadd.f32 %v193, 1.0
        %v207 = vadd.f32 %v194, 1.0
        %vm208 = vcmp.eq.f32.partialorder %v199, %v206
        %vm209 = vcmp.eq.f32.partialorder %v199, %v207
        %v210 = vsel %vm208, %v195, 0.0
        %v211 = vsel %vm209, %v196, 0.0
        %v212 = vadd.f32 %v204, %v210
        %v213 = vadd.f32 %v205, %v211
        %v214 = vpack.c.bf16 %v213, %v212
        %s215 = ssub.f32 %s179, %s176
        %s216 = smul.f32 %s215, 0.14285715
        %v217 = vstv %s216
        %v218 = vmul.f32 %v199, %v217
        %v219 = vstv %s176
        %v220 = vadd.f32 %v219, %v218
        %v221 = vfloor.f32 %v220
        %v222 = vsub.f32 %v220, %v221
        %vm223 = vcmp.eq.f32.partialorder %v183, %v221
        %vm224 = vcmp.eq.f32.partialorder %v184, %v221
        %v225 = vsub.f32 1.0, %v222
        %v226 = vsel %vm223, %v225, 0.0
        %v227 = vsel %vm224, %v225, 0.0
        %v228 = vadd.f32 %v221, 1.0
        %vm229 = vcmp.eq.f32.partialorder %v183, %v228
        %vm230 = vcmp.eq.f32.partialorder %v184, %v228
        %v231 = vsel %vm229, %v222, 0.0
        %v232 = vsel %vm230, %v222, 0.0
        %v233 = vadd.f32 %v226, %v231
        %v234 = vadd.f32 %v227, %v232
        %v235 = vpack.c.bf16 %v234, %v233
        %v236 = vld [vmem:[%s145] sm:$0xf]
        %v237 = vld [vmem:[%s145 + $0x4] sm:$0xf]
        %v240 = vunpack.c.l.b16 %v236
        %v241 = vunpack.c.l.b16 %v237
        %v242 = vpack.c.b16 %v241, %v240
        %vm244 = vcmask 130048
        %v246 = vsel %vm244, %v214, 0
        %248 = vmatpush.bf16.msra.mxu0 0
        %249 = vmatpush.bf16.msra.mxu0 0
        %250 = vmatpush.bf16.msra.mxu0 0
        %251 = vmatpush.bf16.msra.mxu0 0
        %252 = vmatpush.bf16.msra.mxu0 0
        %253 = vmatpush.bf16.msra.mxu0 0
        %254 = vmatpush.bf16.msra.mxu0 0
        %255 = vmatpush.bf16.msra.mxu0 %v242
        %256 = vmatmul.bf16.gmra.mxu0 %v246
        %v257 = vpop.f32.mrf.mxu0
        %v258 = vadd.f32 0.0, %v257
        %v259 = vpop.f32.mrf.mxu0
        %v260 = vadd.f32 0.0, %v259
        %261 = vdwg.mxu0
        %v262 = vpack.c.bf16 %v258, %v258
        %v263 = vpack.c.bf16 %v260, %v260
        %vm264 = vcmask 125952
        %265 = vst.msk [vmem:[#allocation2] sm:$0xf] %vm264, %v262
        %266 = vst.msk [vmem:[#allocation2 + $0x4] sm:$0xf] %vm264, %v263
        %s267 = scalar_lea.vmem %s145, 8 [#allocation5]
        %v268 = vld [vmem:[%s267] sm:$0xf]
        %v269 = vld [vmem:[%s267 + $0x4] sm:$0xf]
        %v272 = vunpack.c.l.b16 %v268
        %v273 = vunpack.c.l.b16 %v269
        %v274 = vpack.c.b16 %v273, %v272
        %276 = vmatpush.bf16.msra.mxu0 0
        %277 = vmatpush.bf16.msra.mxu0 0
        %278 = vmatpush.bf16.msra.mxu0 0
        %279 = vmatpush.bf16.msra.mxu0 0
        %280 = vmatpush.bf16.msra.mxu0 0
        %281 = vmatpush.bf16.msra.mxu0 0
        %282 = vmatpush.bf16.msra.mxu0 0
        %283 = vmatpush.bf16.msra.mxu0 %v274
        %284 = vmatmul.bf16.gmra.mxu0 %v246
        %v285 = vpop.f32.mrf.mxu0
        %v286 = vadd.f32 0.0, %v285
        %v287 = vpop.f32.mrf.mxu0
        %v288 = vadd.f32 0.0, %v287
        %289 = vdwg.mxu0
        %v290 = vpack.c.bf16 %v286, %v286
        %v291 = vpack.c.bf16 %v288, %v288
        %292 = vst.msk [vmem:[#allocation2 + $0x8] sm:$0xf] %vm264, %v290
        %293 = vst.msk [vmem:[#allocation2 + $0xc] sm:$0xf] %vm264, %v291
        %s294 = scalar_lea.vmem %s145, 16 [#allocation5]
        %v295 = vld [vmem:[%s294] sm:$0xf]
        %v296 = vld [vmem:[%s294 + $0x4] sm:$0xf]
        %v299 = vunpack.c.l.b16 %v295
        %v300 = vunpack.c.l.b16 %v296
        %v301 = vpack.c.b16 %v300, %v299
        %303 = vmatpush.bf16.msra.mxu0 0
        %304 = vmatpush.bf16.msra.mxu0 0
        %305 = vmatpush.bf16.msra.mxu0 0
        %306 = vmatpush.bf16.msra.mxu0 0
        %307 = vmatpush.bf16.msra.mxu0 0
        %308 = vmatpush.bf16.msra.mxu0 0
        %309 = vmatpush.bf16.msra.mxu0 0
        %310 = vmatpush.bf16.msra.mxu0 %v301
        %311 = vmatmul.bf16.gmra.mxu0 %v246
        %v312 = vpop.f32.mrf.mxu0
        %v313 = vadd.f32 0.0, %v312
        %v314 = vpop.f32.mrf.mxu0
        %v315 = vadd.f32 0.0, %v314
        %316 = vdwg.mxu0
        %v317 = vpack.c.bf16 %v313, %v313
        %v318 = vpack.c.bf16 %v315, %v315
        %319 = vst.msk [vmem:[#allocation2 + $0x10] sm:$0xf] %vm264, %v317
        %320 = vst.msk [vmem:[#allocation2 + $0x14] sm:$0xf] %vm264, %v318
        %s321 = scalar_lea.vmem %s145, 24 [#allocation5]
        %v322 = vld [vmem:[%s321] sm:$0xf]
        %v323 = vld [vmem:[%s321 + $0x4] sm:$0xf]
        %v326 = vunpack.c.l.b16 %v322
        %v327 = vunpack.c.l.b16 %v323
        %v328 = vpack.c.b16 %v327, %v326
        %330 = vmatpush.bf16.msra.mxu0 0
        %331 = vmatpush.bf16.msra.mxu0 0
        %332 = vmatpush.bf16.msra.mxu0 0
        %333 = vmatpush.bf16.msra.mxu0 0
        %334 = vmatpush.bf16.msra.mxu0 0
        %335 = vmatpush.bf16.msra.mxu0 0
        %336 = vmatpush.bf16.msra.mxu0 0
        %337 = vmatpush.bf16.msra.mxu0 %v328
        %338 = vmatmul.bf16.gmra.mxu0 %v246
        %v339 = vpop.f32.mrf.mxu0
        %v340 = vadd.f32 0.0, %v339
        %v341 = vpop.f32.mrf.mxu0
        %v342 = vadd.f32 0.0, %v341
        %343 = vdwg.mxu0
        %v344 = vpack.c.bf16 %v340, %v340
        %v345 = vpack.c.bf16 %v342, %v342
        %346 = vst.msk [vmem:[#allocation2 + $0x18] sm:$0xf] %vm264, %v344
        %347 = vst.msk [vmem:[#allocation2 + $0x1c] sm:$0xf] %vm264, %v345
        %v348 = vld [vmem:[#allocation2] sm:$0xf]
        %v349 = vld [vmem:[#allocation2 + $0x4] sm:$0xf]
        %v350 = vld [vmem:[#allocation2 + $0x8] sm:$0xf]
        %v351 = vld [vmem:[#allocation2 + $0xc] sm:$0xf]
        %v352 = vld [vmem:[#allocation2 + $0x10] sm:$0xf]
        %v353 = vld [vmem:[#allocation2 + $0x14] sm:$0xf]
        %v354 = vld [vmem:[#allocation2 + $0x18] sm:$0xf]
        %v355 = vld [vmem:[#allocation2 + $0x1c] sm:$0xf]
        %v364 = vunpack.c.l.b16 %v348
        %v365 = vunpack.c.l.b16 %v349
        %v366 = vunpack.c.l.b16 %v350
        %v367 = vunpack.c.l.b16 %v351
        %v368 = vunpack.c.l.b16 %v352
        %v369 = vunpack.c.l.b16 %v353
        %v370 = vunpack.c.l.b16 %v354
        %v371 = vunpack.c.l.b16 %v355
        %v372 = vpack.c.b16 %v365, %v364
        %v373 = vpack.c.b16 %v367, %v366
        %v374 = vpack.c.b16 %v369, %v368
        %v375 = vpack.c.b16 %v371, %v370
        %v377 = vsel %vm244, %v372, 0
        %v380 = vsel %vm244, %v373, 0
        %v383 = vsel %vm244, %v374, 0
        %v386 = vsel %vm244, %v375, 0
        %388 = vmatpush.bf16.msra.mxu0 0
        %389 = vmatpush.bf16.msra.mxu0 0
        %390 = vmatpush.bf16.msra.mxu0 0
        %391 = vmatpush.bf16.msra.mxu0 0
        %392 = vmatpush.bf16.msra.mxu0 0
        %393 = vmatpush.bf16.msra.mxu0 0
        %394 = vmatpush.bf16.msra.mxu0 0
        %395 = vmatpush.bf16.msra.mxu0 %v235
        %396 = vmatmul.bf16.gmra.mxu0 %v377
        %v397 = vpop.f32.mrf.mxu0
        %v398 = vadd.f32 0.0, %v397
        %v399 = vpop.f32.mrf.mxu0
        %400 = vmatmul.bf16.gmra.mxu0 %v380
        %v401 = vpop.f32.mrf.mxu0
        %v402 = vadd.f32 0.0, %v401
        %v403 = vpop.f32.mrf.mxu0
        %404 = vmatmul.bf16.gmra.mxu0 %v383
        %v405 = vpop.f32.mrf.mxu0
        %v406 = vadd.f32 0.0, %v405
        %v407 = vpop.f32.mrf.mxu0
        %408 = vmatmul.bf16.gmra.mxu0 %v386
        %v409 = vpop.f32.mrf.mxu0
        %v410 = vadd.f32 0.0, %v409
        %v411 = vpop.f32.mrf.mxu0
        %412 = vdwg.mxu0
        %vm413 = vcmask 64512
        %414 = vst.msk [vmem:[%s164] sm:$0xff] %vm413, %v398
        %s415 = scalar_lea.vmem %s164, 8 [#allocation8]
        %416 = vst.msk [vmem:[%s415] sm:$0xff] %vm413, %v402
        %s417 = scalar_lea.vmem %s164, 16 [#allocation8]
        %418 = vst.msk [vmem:[%s417] sm:$0xff] %vm413, %v406
        %s419 = scalar_lea.vmem %s164, 24 [#allocation8]
        %420 = vst.msk [vmem:[%s419] sm:$0xff] %vm413, %v410
        %s421 = sand.u32 %s77, 1
        %s422 = scalar_lea.sflag [#allocation7], %s421
        %s423 = sand.u32 %s77, 1
        %s424 = smul.addr %s423, 32
        %s425 = scalar_lea.vmem [#allocation8], %s424
        // Predicated region
        $region29: #{tpu_custom_call.1} parent=23 // pred_check
          %p426 = pneg %p87
        $region30: #{tpu_custom_call.1} parent=23 // pred_check_branch
          %428 = sbr.rel (%p426) target = $region32
        $region31: #{tpu_custom_call.1} parent=23 // pred_region
          %s429 = smul.u32 4, %s32
          %431 = vsyncadd %s422, 0
          %s432 = smul.addr %s31, 4
          %s433 = sadd.s32 %s429, %s432
          %s434 = smul.addr %s433, 8
          %s435 = scalar_lea.hbm %s2, %s434
          %s436 = sshll.u32 %s425, 4
          %s437 = int_to_ptr.vmem [resolvable:$true] %s436
          %s438 = sshll.u32 %s435, 4
          %s439 = int_to_ptr.hbm [resolvable:$true] %s438
          %444 = dma.vmem_to_hbm [thread:$0]  %s437, 512, %s439, %s422, 128, 128, 8
        $region32: #{tpu_custom_call.1} parent=23 // pred_fallthru
          _
      $region24: #{tpu_custom_call.1} parent=5 // pred_fallthru
        _
      %p445 = scmp.le.s32.totalorder 2, %s22
      // Predicated region
      $region33: #{tpu_custom_call.1} parent=5 // pred_check
        %p446 = pneg %p445
      $region34: #{tpu_custom_call.1} parent=5 // pred_check_branch
        %448 = sbr.rel (%p446) target = $region36
      $region35: #{tpu_custom_call.1} parent=5 // pred_region
        %s449 = ssub.s32 %s22, 2
        // Predicated region
        $region37: #{tpu_custom_call.1} parent=35 // pred_check
          %p450 = pneg %p93
        $region38: #{tpu_custom_call.1} parent=35 // pred_check_branch
          %452 = sbr.rel (%p450) target = $region40
        $region39: #{tpu_custom_call.1} parent=35 // pred_region
          %s453 = sand.u32 %s78, 1
          %s454 = scalar_lea.sflag [#allocation7], %s453
          %s455 = sand.u32 %s78, 1
          %s456 = smul.addr %s455, 32
          %s457 = scalar_lea.vmem [#allocation8], %s456
          %459 = dma.done %s454, 512
        $region40: #{tpu_custom_call.1} parent=35 // pred_fallthru
          _
      $region36: #{tpu_custom_call.1} parent=5 // pred_fallthru
        _
    $region6: #{tpu_custom_call.1} parent=1 // loop_footer
      %s26 = sadd.s32 1, %s22
    $region7: #{tpu_custom_call.1} parent=1 // loop_footer_branch
      %21 = sbr.rel target = $region3
    $region8: #{tpu_custom_call.1} parent=1 // loop_exit
      _
    %460 = vsyncpa [#allocation6], 1
    %s461 = scalar_lea.sflag [#allocation6], 1
    %462 = vsyncpa %s461, 1
    %463 = vsyncpa [#allocation7], 1
    %s464 = scalar_lea.sflag [#allocation7], 1
    %465 = vsyncpa %s464, 1

</llo_original>
